<compile_context>
chip_gen: v7x
topology: tpu7x:2x2x1
jax: 0.10.0
libtpu: 0.0.40
codegen_flags: <defaults>
</compile_context>

<pallas_src>
import functools

import jax
import jax.numpy as jnp
from jax import lax
from jax.experimental import pallas as pl
from jax.experimental.pallas import tpu as pltpu


def _powers_sum(t, powers):
    """sum_k t**p_k for positive integer p_k via shared binary exponentiation.

    For powers (16, 8, 4, 2, 1) this is 4 squarings + 4 adds (pure VPU work).
    Trace-time Python; fully unrolled in the kernel.
    """
    max_p = max(powers)
    sq = [t]                                     # sq[j] = t ** (2**j)
    while (1 << len(sq)) <= max_p:
        sq.append(sq[-1] * sq[-1])
    total = None
    for p in powers:
        acc = None
        j = 0
        while p:
            if p & 1:
                acc = sq[j] if acc is None else acc * sq[j]
            p >>= 1
            j += 1
        total = acc if total is None else total + acc
    return total


def _mmd_kernel(x_ref, y_ref, out_ref, *, multipliers, bandwidth):
    # x_ref: (n_x, Dp) VMEM, y_ref: (n_y, Dp) VMEM, out_ref: (1, 1) SMEM.
    x = x_ref[...].astype(jnp.float32)
    y = y_ref[...].astype(jnp.float32)
    n_x = x.shape[0]
    n_y = y.shape[0]
    n = n_x + n_y

    # Row-wise squared norms (2-D column vectors; only tiny transposes below).
    sx = jnp.sum(x * x, axis=1, keepdims=True)   # (n_x, 1)
    sy = jnp.sum(y * y, axis=1, keepdims=True)   # (n_y, 1)

    # Contract the last dim of both operands: a @ b.T without materializing b.T.
    dn = (((1,), (1,)), ((), ()))

    def sqdist(a, b, sa_col, sb_col):
        g = lax.dot_general(a, b, dn, preferred_element_type=jnp.float32)  # MXU
        return jnp.maximum(sa_col + sb_col.T - 2.0 * g, 0.0)

    d_xx = sqdist(x, x, sx, sx)                  # (n_x, n_x)
    d_xy = sqdist(x, y, sx, sy)                  # (n_x, n_y)
    d_yy = sqdist(y, y, sy, sy)                  # (n_y, n_y)

    # Bandwidth of Z=[X;Y]: sum(all pairwise d2) / (N^2 - N). Uses symmetry of
    # the XY block instead of materializing the full NxN matrix.
    if bandwidth is None:
        sum_d2 = jnp.sum(d_xx) + 2.0 * jnp.sum(d_xy) + jnp.sum(d_yy)
        bw = sum_d2 / float(n * n - n)
    else:
        bw = jnp.float32(bandwidth)

    # sum_k exp(-d2 / (bw * m_k)).
    m_max = max(multipliers)
    ratios = [m_max / m for m in multipliers]
    int_ratios = [int(round(r)) for r in ratios]
    use_powers = all(abs(r - ir) < 1e-9 and ir >= 1
                     for r, ir in zip(ratios, int_ratios))

    if use_powers:
        # Single exp per element; scalar reciprocal hoisted out of the vector op.
        c0 = -1.0 / (bw * m_max)

        def rbf_block_sum(d2):
            t = jnp.exp(d2 * c0)
            return jnp.sum(_powers_sum(t, int_ratios))
    else:
        # General fallback (non power-of-two multipliers): one exp per
        # multiplier, coefficients still hoisted to scalars (no vector divide).
        inv_bw = 1.0 / bw

        def rbf_block_sum(d2):
            acc = None
            for m in multipliers:
                term = jnp.sum(jnp.exp(d2 * (inv_bw * (-1.0 / m))))
                acc = term if acc is None else acc + term
            return acc

    xx = rbf_block_sum(d_xx) / float(n_x * n_x)
    xy = rbf_block_sum(d_xy) / float(n_x * n_y)
    yy = rbf_block_sum(d_yy) / float(n_y * n_y)

    out_ref[0, 0] = xx - 2.0 * xy + yy


def mmd_loss(x, y, *, n_kernels=5, mul_factor=2.0, bandwidth=None):
    """MMDLoss.forward(X, Y) with RBF(n_kernels, mul_factor, bandwidth)."""
    n_x, d = x.shape
    n_y, d2 = y.shape
    assert d == d2, "feature dims must match"

    # bandwidth_multipliers = mul_factor ** (arange(n_kernels) - n_kernels // 2)
    multipliers = tuple(
        float(mul_factor ** (i - n_kernels // 2)) for i in range(n_kernels)
    )

    # Lane-pad the feature dim with zeros (no effect on norms / dot products).
    d_pad = ((d + 127) // 128) * 128
    if d_pad != d:
        pad = ((0, 0), (0, d_pad - d))
        x = jnp.pad(x.astype(jnp.float32), pad)
        y = jnp.pad(y.astype(jnp.float32), pad)
    else:
        x = x.astype(jnp.float32)
        y = y.astype(jnp.float32)

    n = n_x + n_y
    n_pairs = n_x * n_x + n_x * n_y + n_y * n_y
    cost = pl.CostEstimate(
        flops=2 * n_pairs * d_pad + 16 * n_pairs,   # Gram blocks + RBF elementwise
        transcendentals=n_pairs,                    # one exp per pair (power trick)
        bytes_accessed=4 * n * d_pad + 4,
    )
    vmem_est = 4 * (2 * n * d_pad + 8 * n_pairs) + (1 << 20)
    vmem_limit = int(min(max(vmem_est, 16 * 2**20), 64 * 2**20))

    kernel = functools.partial(
        _mmd_kernel, multipliers=multipliers, bandwidth=bandwidth
    )
    out = pl.pallas_call(
        kernel,
        out_shape=jax.ShapeDtypeStruct((1, 1), jnp.float32),
        in_specs=[
            pl.BlockSpec(memory_space=pltpu.MemorySpace.VMEM),
            pl.BlockSpec(memory_space=pltpu.MemorySpace.VMEM),
        ],
        out_specs=pl.BlockSpec(memory_space=pltpu.MemorySpace.SMEM),
        compiler_params=pltpu.CompilerParams(vmem_limit_bytes=vmem_limit),
        cost_estimate=cost,
    )(x, y)
    return out[0, 0]


def _mmd_loss_ref(x, y, *, n_kernels=5, mul_factor=2.0):
    # Pure-JAX reference mirroring the PyTorch module (for correctness check).
    multipliers = jnp.asarray(
        [mul_factor ** (i - n_kernels // 2) for i in range(n_kernels)], jnp.float32
    )
    z = jnp.concatenate([x, y], axis=0).astype(jnp.float32)
    n = z.shape[0]
    d2 = jnp.maximum(
        jnp.sum(z * z, 1)[:, None] + jnp.sum(z * z, 1)[None, :] - 2.0 * z @ z.T, 0.0
    )
    bw = jnp.sum(d2) / (n * n - n)
    k = jnp.sum(jnp.exp(-d2[None, ...] / (bw * multipliers)[:, None, None]), axis=0)
    nx = x.shape[0]
    xx = jnp.mean(k[:nx, :nx])
    xy = jnp.mean(k[:nx, nx:])
    yy = jnp.mean(k[nx:, nx:])
    return xx - 2.0 * xy + yy


if __name__ == "__main__":
    key = jax.random.PRNGKey(0)
    kx, ky = jax.random.split(key)
    # Small shapes: batch of 8 samples each, 32 features.
    X = jax.random.normal(kx, (8, 32), dtype=jnp.float32)
    Y = jax.random.normal(ky, (8, 32), dtype=jnp.float32) + 0.5

    loss = jax.block_until_ready(mmd_loss(X, Y))
    ref = jax.block_until_ready(_mmd_loss_ref(X, Y))
    assert jnp.allclose(loss, ref, atol=1e-4, rtol=1e-4), (loss, ref)
    print("KERNEL_OK")
</pallas_src>

<mosaic_0001>
module attributes {stable_mosaic.version = 11 : i64} {
  func.func @_mmd_kernel(%arg0: memref<8x128xf32, #tpu.memory_space<vmem>>, %arg1: memref<8x128xf32, #tpu.memory_space<vmem>>, %arg2: memref<1x1xf32, #tpu.memory_space<smem>>) attributes {dimension_semantics = [], scalar_prefetch = 0 : i64, scratch_operands = 0 : i64, tpu.core_type = #tpu.core_type<tc>} {
    %c0 = arith.constant 0 : index
    %c0_0 = arith.constant 0 : index
    %0 = vector.load %arg0[%c0, %c0_0] : memref<8x128xf32, #tpu.memory_space<vmem>>, vector<8x128xf32>
    %c0_1 = arith.constant 0 : index
    %c0_2 = arith.constant 0 : index
    %1 = vector.load %arg1[%c0_1, %c0_2] : memref<8x128xf32, #tpu.memory_space<vmem>>, vector<8x128xf32>
    %2 = arith.mulf %0, %0 : vector<8x128xf32>
    %cst = arith.constant dense<0.000000e+00> : vector<8xf32>
    %3 = vector.multi_reduction <add>, %2, %cst [1] : vector<8x128xf32> to vector<8xf32>
    %4 = vector.shape_cast %3 : vector<8xf32> to vector<8x1xf32>
    %5 = arith.mulf %1, %1 : vector<8x128xf32>
    %cst_3 = arith.constant dense<0.000000e+00> : vector<8xf32>
    %6 = vector.multi_reduction <add>, %5, %cst_3 [1] : vector<8x128xf32> to vector<8xf32>
    %7 = vector.shape_cast %6 : vector<8xf32> to vector<8x1xf32>
    %cst_4 = arith.constant dense<0.000000e+00> : vector<8x8xf32>
    %8 = tpu.matmul %0, %0, %cst_4 {dimension_numbers = #tpu.dot_dimension_numbers<[1], [1], [0], [0], [0, 0, 1, 0], [], []>} : vector<8x128xf32>, vector<8x128xf32>, vector<8x8xf32> -> vector<8x8xf32>
    %9 = tpu.transpose %4, [1, 0] : vector<8x1xf32> -> vector<1x8xf32>
    %10 = vector.broadcast %4 : vector<8x1xf32> to vector<8x8xf32>
    %11 = vector.broadcast %9 : vector<1x8xf32> to vector<8x8xf32>
    %12 = arith.addf %10, %11 : vector<8x8xf32>
    %cst_5 = arith.constant 2.000000e+00 : f32
    %13 = vector.broadcast %cst_5 : f32 to vector<8x8xf32>
    %14 = arith.mulf %13, %8 : vector<8x8xf32>
    %15 = arith.subf %12, %14 : vector<8x8xf32>
    %cst_6 = arith.constant 0.000000e+00 : f32
    %16 = vector.broadcast %cst_6 : f32 to vector<8x8xf32>
    %17 = arith.maximumf %15, %16 : vector<8x8xf32>
    %cst_7 = arith.constant dense<0.000000e+00> : vector<8x8xf32>
    %18 = tpu.matmul %0, %1, %cst_7 {dimension_numbers = #tpu.dot_dimension_numbers<[1], [1], [0], [0], [0, 0, 1, 0], [], []>} : vector<8x128xf32>, vector<8x128xf32>, vector<8x8xf32> -> vector<8x8xf32>
    %19 = tpu.transpose %7, [1, 0] : vector<8x1xf32> -> vector<1x8xf32>
    %20 = vector.broadcast %4 : vector<8x1xf32> to vector<8x8xf32>
    %21 = vector.broadcast %19 : vector<1x8xf32> to vector<8x8xf32>
    %22 = arith.addf %20, %21 : vector<8x8xf32>
    %cst_8 = arith.constant 2.000000e+00 : f32
    %23 = vector.broadcast %cst_8 : f32 to vector<8x8xf32>
    %24 = arith.mulf %23, %18 : vector<8x8xf32>
    %25 = arith.subf %22, %24 : vector<8x8xf32>
    %cst_9 = arith.constant 0.000000e+00 : f32
    %26 = vector.broadcast %cst_9 : f32 to vector<8x8xf32>
    %27 = arith.maximumf %25, %26 : vector<8x8xf32>
    %cst_10 = arith.constant dense<0.000000e+00> : vector<8x8xf32>
    %28 = tpu.matmul %1, %1, %cst_10 {dimension_numbers = #tpu.dot_dimension_numbers<[1], [1], [0], [0], [0, 0, 1, 0], [], []>} : vector<8x128xf32>, vector<8x128xf32>, vector<8x8xf32> -> vector<8x8xf32>
    %29 = tpu.transpose %7, [1, 0] : vector<8x1xf32> -> vector<1x8xf32>
    %30 = vector.broadcast %7 : vector<8x1xf32> to vector<8x8xf32>
    %31 = vector.broadcast %29 : vector<1x8xf32> to vector<8x8xf32>
    %32 = arith.addf %30, %31 : vector<8x8xf32>
    %cst_11 = arith.constant 2.000000e+00 : f32
    %33 = vector.broadcast %cst_11 : f32 to vector<8x8xf32>
    %34 = arith.mulf %33, %28 : vector<8x8xf32>
    %35 = arith.subf %32, %34 : vector<8x8xf32>
    %cst_12 = arith.constant 0.000000e+00 : f32
    %36 = vector.broadcast %cst_12 : f32 to vector<8x8xf32>
    %37 = arith.maximumf %35, %36 : vector<8x8xf32>
    %38 = vector.shape_cast %17 : vector<8x8xf32> to vector<1x8x8xf32>
    %cst_13 = arith.constant dense<0.000000e+00> : vector<1xf32>
    %39 = vector.multi_reduction <add>, %38, %cst_13 [1, 2] : vector<1x8x8xf32> to vector<1xf32>
    %40 = vector.shape_cast %39 : vector<1xf32> to vector<1x1x1xf32>
    %41 = vector.extract %40[0, 0, 0] : f32 from vector<1x1x1xf32>
    %42 = vector.shape_cast %27 : vector<8x8xf32> to vector<1x8x8xf32>
    %cst_14 = arith.constant dense<0.000000e+00> : vector<1xf32>
    %43 = vector.multi_reduction <add>, %42, %cst_14 [1, 2] : vector<1x8x8xf32> to vector<1xf32>
    %44 = vector.shape_cast %43 : vector<1xf32> to vector<1x1x1xf32>
    %45 = vector.extract %44[0, 0, 0] : f32 from vector<1x1x1xf32>
    %cst_15 = arith.constant 2.000000e+00 : f32
    %46 = arith.mulf %cst_15, %45 : f32
    %47 = arith.addf %41, %46 : f32
    %48 = vector.shape_cast %37 : vector<8x8xf32> to vector<1x8x8xf32>
    %cst_16 = arith.constant dense<0.000000e+00> : vector<1xf32>
    %49 = vector.multi_reduction <add>, %48, %cst_16 [1, 2] : vector<1x8x8xf32> to vector<1xf32>
    %50 = vector.shape_cast %49 : vector<1xf32> to vector<1x1x1xf32>
    %51 = vector.extract %50[0, 0, 0] : f32 from vector<1x1x1xf32>
    %52 = arith.addf %47, %51 : f32
    %cst_17 = arith.constant 2.400000e+02 : f32
    %53 = arith.divf %52, %cst_17 : f32
    %cst_18 = arith.constant 4.000000e+00 : f32
    %54 = arith.mulf %53, %cst_18 : f32
    %cst_19 = arith.constant -1.000000e+00 : f32
    %55 = arith.divf %cst_19, %54 : f32
    %56 = vector.broadcast %55 : f32 to vector<8x8xf32>
    %57 = arith.mulf %17, %56 : vector<8x8xf32>
    %58 = math.exp %57 : vector<8x8xf32>
    %59 = arith.mulf %58, %58 : vector<8x8xf32>
    %60 = arith.mulf %59, %59 : vector<8x8xf32>
    %61 = arith.mulf %60, %60 : vector<8x8xf32>
    %62 = arith.mulf %61, %61 : vector<8x8xf32>
    %63 = arith.addf %62, %61 : vector<8x8xf32>
    %64 = arith.addf %63, %60 : vector<8x8xf32>
    %65 = arith.addf %64, %59 : vector<8x8xf32>
    %66 = arith.addf %65, %58 : vector<8x8xf32>
    %67 = vector.shape_cast %66 : vector<8x8xf32> to vector<1x8x8xf32>
    %cst_20 = arith.constant dense<0.000000e+00> : vector<1xf32>
    %68 = vector.multi_reduction <add>, %67, %cst_20 [1, 2] : vector<1x8x8xf32> to vector<1xf32>
    %69 = vector.shape_cast %68 : vector<1xf32> to vector<1x1x1xf32>
    %70 = vector.extract %69[0, 0, 0] : f32 from vector<1x1x1xf32>
    %cst_21 = arith.constant 6.400000e+01 : f32
    %71 = arith.divf %70, %cst_21 : f32
    %72 = vector.broadcast %55 : f32 to vector<8x8xf32>
    %73 = arith.mulf %27, %72 : vector<8x8xf32>
    %74 = math.exp %73 : vector<8x8xf32>
    %75 = arith.mulf %74, %74 : vector<8x8xf32>
    %76 = arith.mulf %75, %75 : vector<8x8xf32>
    %77 = arith.mulf %76, %76 : vector<8x8xf32>
    %78 = arith.mulf %77, %77 : vector<8x8xf32>
    %79 = arith.addf %78, %77 : vector<8x8xf32>
    %80 = arith.addf %79, %76 : vector<8x8xf32>
    %81 = arith.addf %80, %75 : vector<8x8xf32>
    %82 = arith.addf %81, %74 : vector<8x8xf32>
    %83 = vector.shape_cast %82 : vector<8x8xf32> to vector<1x8x8xf32>
    %cst_22 = arith.constant dense<0.000000e+00> : vector<1xf32>
    %84 = vector.multi_reduction <add>, %83, %cst_22 [1, 2] : vector<1x8x8xf32> to vector<1xf32>
    %85 = vector.shape_cast %84 : vector<1xf32> to vector<1x1x1xf32>
    %86 = vector.extract %85[0, 0, 0] : f32 from vector<1x1x1xf32>
    %cst_23 = arith.constant 6.400000e+01 : f32
    %87 = arith.divf %86, %cst_23 : f32
    %88 = vector.broadcast %55 : f32 to vector<8x8xf32>
    %89 = arith.mulf %37, %88 : vector<8x8xf32>
    %90 = math.exp %89 : vector<8x8xf32>
    %91 = arith.mulf %90, %90 : vector<8x8xf32>
    %92 = arith.mulf %91, %91 : vector<8x8xf32>
    %93 = arith.mulf %92, %92 : vector<8x8xf32>
    %94 = arith.mulf %93, %93 : vector<8x8xf32>
    %95 = arith.addf %94, %93 : vector<8x8xf32>
    %96 = arith.addf %95, %92 : vector<8x8xf32>
    %97 = arith.addf %96, %91 : vector<8x8xf32>
    %98 = arith.addf %97, %90 : vector<8x8xf32>
    %99 = vector.shape_cast %98 : vector<8x8xf32> to vector<1x8x8xf32>
    %cst_24 = arith.constant dense<0.000000e+00> : vector<1xf32>
    %100 = vector.multi_reduction <add>, %99, %cst_24 [1, 2] : vector<1x8x8xf32> to vector<1xf32>
    %101 = vector.shape_cast %100 : vector<1xf32> to vector<1x1x1xf32>
    %102 = vector.extract %101[0, 0, 0] : f32 from vector<1x1x1xf32>
    %cst_25 = arith.constant 6.400000e+01 : f32
    %103 = arith.divf %102, %cst_25 : f32
    %cst_26 = arith.constant 2.000000e+00 : f32
    %104 = arith.mulf %cst_26, %87 : f32
    %105 = arith.subf %71, %104 : f32
    %106 = arith.addf %105, %103 : f32
    %c0_27 = arith.constant 0 : index
    %c0_28 = arith.constant 0 : index
    %107 = memref.load %arg2[%c0_27, %c0_28] : memref<1x1xf32, #tpu.memory_space<smem>>
    memref.store %106, %arg2[%c0_27, %c0_28] : memref<1x1xf32, #tpu.memory_space<smem>>
    return
  }
}

</mosaic_0001>

<llo_original>
// kernel: tpu_custom_call.1
$region0: #{tpu_custom_call.1}
  #allocation0 [shape = 'u32[]', space=smem, size = 0x4, offset = 0x4, fixed_abs, tag = 'smem constant byte address 0x4 - core index']
  #allocation1 [shape = 'u32[144,128]{1,0:T(1,128)}', space=vmem, size = 0x12000, scoped, tag = 'internal scratch']
  %s0 = inlined_call_operand.hbm [shape: f32[8,128], index: 0, kind: input, shape index: {}]
  %s1 = inlined_call_operand.hbm [shape: f32[8,128], index: 1, kind: input, shape index: {}]
  %s2 = inlined_call_operand.hbm [shape: f32[1,1], index: 2, kind: output, shape index: {}]
  %s3 = sld [smem:[#allocation0]]
  $region26: #{tpu_custom_call.1} parent=0
    _
  %s5 = ssub.s32 1, %s3
  %s6 = scalar_select 0, %s5, %s3
  $region1: #{tpu_custom_call.1} parent=0
    #allocation2 [shape = 'u8[4096]{0}', space=vmem, size = 0x1000, scoped, tag = 'input window, operand 0, single buffered']
    #allocation3 [shape = 's32[1]{0}', space=sflag, size = 0x4, scoped, tag = 'scoped memory for tpu_custom_call.1']
    #allocation4 [shape = 's32[1]{0}', space=sflag, size = 0x4, scoped, tag = 'scoped memory for tpu_custom_call.1']
    #allocation5 [shape = 'u8[4096]{0}', space=vmem, size = 0x1000, scoped, tag = 'input window, operand 1, single buffered']
    #allocation6 [shape = 's32[1]{0}', space=sflag, size = 0x4, scoped, tag = 'scoped memory for tpu_custom_call.1']
    #allocation7 [shape = 'u8[512]{0}', space=smem, size = 0x200, scoped, tag = 'output window, operand 0, single buffered']
    %7 = vsyncpa [#allocation3], 0
    %8 = vsyncpa [#allocation6], 0
    %9 = vsyncpa [#allocation4], 0
    // Predicated region
    $region2: #{tpu_custom_call.1} parent=1 // pred_check
      _
    $region3: #{tpu_custom_call.1} parent=1 // pred_check_branch
      %11 = sbr.rel (0) target = $region5
    $region4: #{tpu_custom_call.1} parent=1 // pred_region
      %s13 = ssub.s32 128, 128
      %14 = vsyncadd [#allocation3], %s13
      %s16 = sshll.u32 [#allocation2], 4
      %s17 = int_to_ptr.vmem [resolvable:$true] %s16
      %19 = dma.hbm_to_vmem [thread:$0]  %s0, 128, %s17, [#allocation3]
    $region5: #{tpu_custom_call.1} parent=1 // pred_fallthru
      _
    // Predicated region
    $region6: #{tpu_custom_call.1} parent=1 // pred_check
      _
    $region7: #{tpu_custom_call.1} parent=1 // pred_check_branch
      %21 = sbr.rel (0) target = $region9
    $region8: #{tpu_custom_call.1} parent=1 // pred_region
      %s23 = ssub.s32 128, 128
      %24 = vsyncadd [#allocation6], %s23
      %s26 = sshll.u32 [#allocation5], 4
      %s27 = int_to_ptr.vmem [resolvable:$true] %s26
      %29 = dma.hbm_to_vmem [thread:$0]  %s1, 128, %s27, [#allocation6]
    $region9: #{tpu_custom_call.1} parent=1 // pred_fallthru
      _
    // Predicated region
    $region10: #{tpu_custom_call.1} parent=1 // pred_check
      _
    $region11: #{tpu_custom_call.1} parent=1 // pred_check_branch
      %31 = sbr.rel (0) target = $region13
    $region12: #{tpu_custom_call.1} parent=1 // pred_region
      %32 = dma.done [#allocation3], 128
    $region13: #{tpu_custom_call.1} parent=1 // pred_fallthru
      _
    // Predicated region
    $region14: #{tpu_custom_call.1} parent=1 // pred_check
      _
    $region15: #{tpu_custom_call.1} parent=1 // pred_check_branch
      %34 = sbr.rel (0) target = $region17
    $region16: #{tpu_custom_call.1} parent=1 // pred_region
      %35 = dma.done [#allocation6], 128
    $region17: #{tpu_custom_call.1} parent=1 // pred_fallthru
      _
    %v36 = vld [vmem:[#allocation2] sm:$0xff]
    %v37 = vld [vmem:[#allocation5] sm:$0xff]
    %v38 = vmul.f32 %v36, %v36
    %39 = vadd.xlane.f32.xlu0 %v38
    %v40 = vpop.xlane.xlu0 %39
    %v41 = vmul.f32 %v37, %v37
    %42 = vadd.xlane.f32.xlu0 %v41
    %v43 = vpop.xlane.xlu0 %42
    %44 = vmatprep.subr.mxu0 0.0
    %45 = vmatpush1.xpose.msra.mxu0 %v36
    %46 = vmatprep.subr.mxu0 0.0
    %47 = vmatpush1.xpose.msra.mxu0 0.0
    %48 = vmatprep.subr.mxu0 0.0
    %49 = vmatpush1.xpose.msra.mxu0 0.0
    %50 = vmatprep.subr.mxu0 0.0
    %51 = vmatpush1.xpose.msra.mxu0 0.0
    %52 = vmatprep.subr.mxu0 0.0
    %53 = vmatpush1.xpose.msra.mxu0 0.0
    %54 = vmatprep.subr.mxu0 0.0
    %55 = vmatpush1.xpose.msra.mxu0 0.0
    %56 = vmatprep.subr.mxu0 0.0
    %57 = vmatpush1.xpose.msra.mxu0 0.0
    %58 = vmatprep.subr.mxu0 0.0
    %59 = vmatpush1.xpose.msra.mxu0 0.0
    %60 = vmatprep.subr.mxu0 0.0
    %61 = vmatpush1.xpose.msra.mxu0 0.0
    %62 = vmatprep.subr.mxu0 0.0
    %63 = vmatpush1.xpose.msra.mxu0 0.0
    %64 = vmatprep.subr.mxu0 0.0
    %65 = vmatpush1.xpose.msra.mxu0 0.0
    %66 = vmatprep.subr.mxu0 0.0
    %67 = vmatpush1.xpose.msra.mxu0 0.0
    %68 = vmatprep.subr.mxu0 0.0
    %69 = vmatpush1.xpose.msra.mxu0 0.0
    %70 = vmatprep.subr.mxu0 0.0
    %71 = vmatpush1.xpose.msra.mxu0 0.0
    %72 = vmatprep.subr.mxu0 0.0
    %73 = vmatpush1.xpose.msra.mxu0 0.0
    %74 = vmatprep.subr.mxu0 0.0
    %75 = vmatpush1.xpose.msra.mxu0 0.0
    %76 = vmatprep.subr.mxu0 0.0
    %77 = vmatpush1.xpose.msra.mxu0 0.0
    %78 = vmatprep.subr.mxu0 0.0
    %79 = vmatpush1.xpose.msra.mxu0 0.0
    %80 = vmatprep.subr.mxu0 0.0
    %81 = vmatpush1.xpose.msra.mxu0 0.0
    %82 = vmatprep.subr.mxu0 0.0
    %83 = vmatpush1.xpose.msra.mxu0 0.0
    %84 = vmatprep.subr.mxu0 0.0
    %85 = vmatpush1.xpose.msra.mxu0 0.0
    %86 = vmatprep.subr.mxu0 0.0
    %87 = vmatpush1.xpose.msra.mxu0 0.0
    %88 = vmatprep.subr.mxu0 0.0
    %89 = vmatpush1.xpose.msra.mxu0 0.0
    %90 = vmatprep.subr.mxu0 0.0
    %91 = vmatpush1.xpose.msra.mxu0 0.0
    %92 = vmatprep.subr.mxu0 0.0
    %93 = vmatpush1.xpose.msra.mxu0 0.0
    %94 = vmatprep.subr.mxu0 0.0
    %95 = vmatpush1.xpose.msra.mxu0 0.0
    %96 = vmatprep.subr.mxu0 0.0
    %97 = vmatpush1.xpose.msra.mxu0 0.0
    %98 = vmatprep.subr.mxu0 0.0
    %99 = vmatpush1.xpose.msra.mxu0 0.0
    %100 = vmatprep.subr.mxu0 0.0
    %101 = vmatpush1.xpose.msra.mxu0 0.0
    %102 = vmatprep.subr.mxu0 0.0
    %103 = vmatpush1.xpose.msra.mxu0 0.0
    %104 = vmatprep.subr.mxu0 0.0
    %105 = vmatpush1.xpose.msra.mxu0 0.0
    %106 = vmatprep.subr.mxu0 0.0
    %107 = vmatpush1.xpose.msra.mxu0 0.0
    %108 = vmatprep.mubr.f32.mxu0 0.0
    %109 = vmatmul.mubr.f32.gmra.mrb[0].mxu0 %v36
    %v110 = vpop.f32.mrb[0].mxu0
    %v111 = vadd.f32 0.0, %v110
    %v112 = vpop.f32.mrb[0].mxu0
    %113 = vdwg.mxu0
    %114 = vxpose.xlu0.b32.start [1/16] %v40, 128
    %115 = vxpose.xlu0.b32.cont [2/16] 0.0, 128
    %116 = vxpose.xlu0.b32.cont [3/16] 0.0, 128
    %117 = vxpose.xlu0.b32.cont [4/16] 0.0, 128
    %118 = vxpose.xlu0.b32.cont [5/16] 0.0, 128
    %119 = vxpose.xlu0.b32.cont [6/16] 0.0, 128
    %120 = vxpose.xlu0.b32.cont [7/16] 0.0, 128
    %121 = vxpose.xlu0.b32.cont [8/16] 0.0, 128
    %122 = vxpose.xlu0.b32.cont [9/16] 0.0, 128
    %123 = vxpose.xlu0.b32.cont [10/16] 0.0, 128
    %124 = vxpose.xlu0.b32.cont [11/16] 0.0, 128
    %125 = vxpose.xlu0.b32.cont [12/16] 0.0, 128
    %126 = vxpose.xlu0.b32.cont [13/16] 0.0, 128
    %127 = vxpose.xlu0.b32.cont [14/16] 0.0, 128
    %128 = vxpose.xlu0.b32.cont [15/16] 0.0, 128
    %129 = vxpose.xlu0.b32.end [16/16] 0.0, 128
    %v130 = vpop.trf.xlu0
    %v131 = vpop.trf.xlu0
    %v132 = vpop.trf.xlu0
    %v133 = vpop.trf.xlu0
    %v134 = vpop.trf.xlu0
    %v135 = vpop.trf.xlu0
    %v136 = vpop.trf.xlu0
    %v137 = vpop.trf.xlu0
    %v138 = vpop.trf.xlu0
    %v139 = vpop.trf.xlu0
    %v140 = vpop.trf.xlu0
    %v141 = vpop.trf.xlu0
    %v142 = vpop.trf.xlu0
    %v143 = vpop.trf.xlu0
    %v144 = vpop.trf.xlu0
    %v145 = vpop.trf.xlu0
    %v146 = vlaneseq
    %v147 = vshrl.u32 %v146, 7
    %v148 = vsub.s32 0, %v147
    %v149 = vrot.slane %v130, %v148
    %v150 = vadd.f32 %v40, %v149
    %v151 = vmul.f32 %v111, 2.0
    %v152 = vsub.f32 %v150, %v151
    %v153 = vmax.f32 %v152, 0.0
    %154 = vmatprep.subr.mxu0 0.0
    %155 = vmatpush1.xpose.msra.mxu0 %v37
    %156 = vmatprep.subr.mxu0 0.0
    %157 = vmatpush1.xpose.msra.mxu0 0.0
    %158 = vmatprep.subr.mxu0 0.0
    %159 = vmatpush1.xpose.msra.mxu0 0.0
    %160 = vmatprep.subr.mxu0 0.0
    %161 = vmatpush1.xpose.msra.mxu0 0.0
    %162 = vmatprep.subr.mxu0 0.0
    %163 = vmatpush1.xpose.msra.mxu0 0.0
    %164 = vmatprep.subr.mxu0 0.0
    %165 = vmatpush1.xpose.msra.mxu0 0.0
    %166 = vmatprep.subr.mxu0 0.0
    %167 = vmatpush1.xpose.msra.mxu0 0.0
    %168 = vmatprep.subr.mxu0 0.0
    %169 = vmatpush1.xpose.msra.mxu0 0.0
    %170 = vmatprep.subr.mxu0 0.0
    %171 = vmatpush1.xpose.msra.mxu0 0.0
    %172 = vmatprep.subr.mxu0 0.0
    %173 = vmatpush1.xpose.msra.mxu0 0.0
    %174 = vmatprep.subr.mxu0 0.0
    %175 = vmatpush1.xpose.msra.mxu0 0.0
    %176 = vmatprep.subr.mxu0 0.0
    %177 = vmatpush1.xpose.msra.mxu0 0.0
    %178 = vmatprep.subr.mxu0 0.0
    %179 = vmatpush1.xpose.msra.mxu0 0.0
    %180 = vmatprep.subr.mxu0 0.0
    %181 = vmatpush1.xpose.msra.mxu0 0.0
    %182 = vmatprep.subr.mxu0 0.0
    %183 = vmatpush1.xpose.msra.mxu0 0.0
    %184 = vmatprep.subr.mxu0 0.0
    %185 = vmatpush1.xpose.msra.mxu0 0.0
    %186 = vmatprep.subr.mxu0 0.0
    %187 = vmatpush1.xpose.msra.mxu0 0.0
    %188 = vmatprep.subr.mxu0 0.0
    %189 = vmatpush1.xpose.msra.mxu0 0.0
    %190 = vmatprep.subr.mxu0 0.0
    %191 = vmatpush1.xpose.msra.mxu0 0.0
    %192 = vmatprep.subr.mxu0 0.0
    %193 = vmatpush1.xpose.msra.mxu0 0.0
    %194 = vmatprep.subr.mxu0 0.0
    %195 = vmatpush1.xpose.msra.mxu0 0.0
    %196 = vmatprep.subr.mxu0 0.0
    %197 = vmatpush1.xpose.msra.mxu0 0.0
    %198 = vmatprep.subr.mxu0 0.0
    %199 = vmatpush1.xpose.msra.mxu0 0.0
    %200 = vmatprep.subr.mxu0 0.0
    %201 = vmatpush1.xpose.msra.mxu0 0.0
    %202 = vmatprep.subr.mxu0 0.0
    %203 = vmatpush1.xpose.msra.mxu0 0.0
    %204 = vmatprep.subr.mxu0 0.0
    %205 = vmatpush1.xpose.msra.mxu0 0.0
    %206 = vmatprep.subr.mxu0 0.0
    %207 = vmatpush1.xpose.msra.mxu0 0.0
    %208 = vmatprep.subr.mxu0 0.0
    %209 = vmatpush1.xpose.msra.mxu0 0.0
    %210 = vmatprep.subr.mxu0 0.0
    %211 = vmatpush1.xpose.msra.mxu0 0.0
    %212 = vmatprep.subr.mxu0 0.0
    %213 = vmatpush1.xpose.msra.mxu0 0.0
    %214 = vmatprep.subr.mxu0 0.0
    %215 = vmatpush1.xpose.msra.mxu0 0.0
    %216 = vmatprep.subr.mxu0 0.0
    %217 = vmatpush1.xpose.msra.mxu0 0.0
    %218 = vmatprep.mubr.f32.mxu0 0.0
    %219 = vmatmul.mubr.f32.gmra.mrb[0].mxu0 %v36
    %v220 = vpop.f32.mrb[0].mxu0
    %v221 = vadd.f32 0.0, %v220
    %v222 = vpop.f32.mrb[0].mxu0
    %223 = vdwg.mxu0
    %224 = vxpose.xlu0.b32.start [1/16] %v43, 128
    %225 = vxpose.xlu0.b32.cont [2/16] 0.0, 128
    %226 = vxpose.xlu0.b32.cont [3/16] 0.0, 128
    %227 = vxpose.xlu0.b32.cont [4/16] 0.0, 128
    %228 = vxpose.xlu0.b32.cont [5/16] 0.0, 128
    %229 = vxpose.xlu0.b32.cont [6/16] 0.0, 128
    %230 = vxpose.xlu0.b32.cont [7/16] 0.0, 128
    %231 = vxpose.xlu0.b32.cont [8/16] 0.0, 128
    %232 = vxpose.xlu0.b32.cont [9/16] 0.0, 128
    %233 = vxpose.xlu0.b32.cont [10/16] 0.0, 128
    %234 = vxpose.xlu0.b32.cont [11/16] 0.0, 128
    %235 = vxpose.xlu0.b32.cont [12/16] 0.0, 128
    %236 = vxpose.xlu0.b32.cont [13/16] 0.0, 128
    %237 = vxpose.xlu0.b32.cont [14/16] 0.0, 128
    %238 = vxpose.xlu0.b32.cont [15/16] 0.0, 128
    %239 = vxpose.xlu0.b32.end [16/16] 0.0, 128
    %v240 = vpop.trf.xlu0
    %v241 = vpop.trf.xlu0
    %v242 = vpop.trf.xlu0
    %v243 = vpop.trf.xlu0
    %v244 = vpop.trf.xlu0
    %v245 = vpop.trf.xlu0
    %v246 = vpop.trf.xlu0
    %v247 = vpop.trf.xlu0
    %v248 = vpop.trf.xlu0
    %v249 = vpop.trf.xlu0
    %v250 = vpop.trf.xlu0
    %v251 = vpop.trf.xlu0
    %v252 = vpop.trf.xlu0
    %v253 = vpop.trf.xlu0
    %v254 = vpop.trf.xlu0
    %v255 = vpop.trf.xlu0
    %v256 = vlaneseq
    %v257 = vshrl.u32 %v256, 7
    %v258 = vsub.s32 0, %v257
    %v259 = vrot.slane %v240, %v258
    %v260 = vadd.f32 %v40, %v259
    %v261 = vmul.f32 %v221, 2.0
    %v262 = vsub.f32 %v260, %v261
    %v263 = vmax.f32 %v262, 0.0
    %264 = vmatprep.subr.mxu0 0.0
    %265 = vmatpush1.xpose.msra.mxu0 %v37
    %266 = vmatprep.subr.mxu0 0.0
    %267 = vmatpush1.xpose.msra.mxu0 0.0
    %268 = vmatprep.subr.mxu0 0.0
    %269 = vmatpush1.xpose.msra.mxu0 0.0
    %270 = vmatprep.subr.mxu0 0.0
    %271 = vmatpush1.xpose.msra.mxu0 0.0
    %272 = vmatprep.subr.mxu0 0.0
    %273 = vmatpush1.xpose.msra.mxu0 0.0
    %274 = vmatprep.subr.mxu0 0.0
    %275 = vmatpush1.xpose.msra.mxu0 0.0
    %276 = vmatprep.subr.mxu0 0.0
    %277 = vmatpush1.xpose.msra.mxu0 0.0
    %278 = vmatprep.subr.mxu0 0.0
    %279 = vmatpush1.xpose.msra.mxu0 0.0
    %280 = vmatprep.subr.mxu0 0.0
    %281 = vmatpush1.xpose.msra.mxu0 0.0
    %282 = vmatprep.subr.mxu0 0.0
    %283 = vmatpush1.xpose.msra.mxu0 0.0
    %284 = vmatprep.subr.mxu0 0.0
    %285 = vmatpush1.xpose.msra.mxu0 0.0
    %286 = vmatprep.subr.mxu0 0.0
    %287 = vmatpush1.xpose.msra.mxu0 0.0
    %288 = vmatprep.subr.mxu0 0.0
    %289 = vmatpush1.xpose.msra.mxu0 0.0
    %290 = vmatprep.subr.mxu0 0.0
    %291 = vmatpush1.xpose.msra.mxu0 0.0
    %292 = vmatprep.subr.mxu0 0.0
    %293 = vmatpush1.xpose.msra.mxu0 0.0
    %294 = vmatprep.subr.mxu0 0.0
    %295 = vmatpush1.xpose.msra.mxu0 0.0
    %296 = vmatprep.subr.mxu0 0.0
    %297 = vmatpush1.xpose.msra.mxu0 0.0
    %298 = vmatprep.subr.mxu0 0.0
    %299 = vmatpush1.xpose.msra.mxu0 0.0
    %300 = vmatprep.subr.mxu0 0.0
    %301 = vmatpush1.xpose.msra.mxu0 0.0
    %302 = vmatprep.subr.mxu0 0.0
    %303 = vmatpush1.xpose.msra.mxu0 0.0
    %304 = vmatprep.subr.mxu0 0.0
    %305 = vmatpush1.xpose.msra.mxu0 0.0
    %306 = vmatprep.subr.mxu0 0.0
    %307 = vmatpush1.xpose.msra.mxu0 0.0
    %308 = vmatprep.subr.mxu0 0.0
    %309 = vmatpush1.xpose.msra.mxu0 0.0
    %310 = vmatprep.subr.mxu0 0.0
    %311 = vmatpush1.xpose.msra.mxu0 0.0
    %312 = vmatprep.subr.mxu0 0.0
    %313 = vmatpush1.xpose.msra.mxu0 0.0
    %314 = vmatprep.subr.mxu0 0.0
    %315 = vmatpush1.xpose.msra.mxu0 0.0
    %316 = vmatprep.subr.mxu0 0.0
    %317 = vmatpush1.xpose.msra.mxu0 0.0
    %318 = vmatprep.subr.mxu0 0.0
    %319 = vmatpush1.xpose.msra.mxu0 0.0
    %320 = vmatprep.subr.mxu0 0.0
    %321 = vmatpush1.xpose.msra.mxu0 0.0
    %322 = vmatprep.subr.mxu0 0.0
    %323 = vmatpush1.xpose.msra.mxu0 0.0
    %324 = vmatprep.subr.mxu0 0.0
    %325 = vmatpush1.xpose.msra.mxu0 0.0
    %326 = vmatprep.subr.mxu0 0.0
    %327 = vmatpush1.xpose.msra.mxu0 0.0
    %328 = vmatprep.mubr.f32.mxu0 0.0
    %329 = vmatmul.mubr.f32.gmra.mrb[0].mxu0 %v37
    %v330 = vpop.f32.mrb[0].mxu0
    %v331 = vadd.f32 0.0, %v330
    %v332 = vpop.f32.mrb[0].mxu0
    %333 = vdwg.mxu0
    %v334 = vadd.f32 %v43, %v259
    %v335 = vmul.f32 %v331, 2.0
    %v336 = vsub.f32 %v334, %v335
    %v337 = vmax.f32 %v336, 0.0
    %vm338 = vcmask 64512
    %v339 = vsel %vm338, %v153, 0.0
    %340 = vadd.xlane.f32.xlu0 %v339
    %v341 = vpop.xlane.xlu0 %340
    %v342 = vrot.slane %v341, 4
    %v343 = vadd.f32 %v341, %v342
    %v344 = vrot.slane %v343, 2
    %v345 = vadd.f32 %v343, %v344
    %v346 = vrot.slane %v345, 1
    %v347 = vadd.f32 %v345, %v346
    %s348 = vtos %v347
    %v349 = vsel %vm338, %v263, 0.0
    %350 = vadd.xlane.f32.xlu0 %v349
    %v351 = vpop.xlane.xlu0 %350
    %v352 = vrot.slane %v351, 4
    %v353 = vadd.f32 %v351, %v352
    %v354 = vrot.slane %v353, 2
    %v355 = vadd.f32 %v353, %v354
    %v356 = vrot.slane %v355, 1
    %v357 = vadd.f32 %v355, %v356
    %s358 = vtos %v357
    %s359 = smul.f32 %s358, 2.0
    %s360 = sadd.f32 %s348, %s359
    %v361 = vsel %vm338, %v337, 0.0
    %362 = vadd.xlane.f32.xlu0 %v361
    %v363 = vpop.xlane.xlu0 %362
    %v364 = vrot.slane %v363, 4
    %v365 = vadd.f32 %v363, %v364
    %v366 = vrot.slane %v365, 2
    %v367 = vadd.f32 %v365, %v366
    %v368 = vrot.slane %v367, 1
    %v369 = vadd.f32 %v367, %v368
    %s370 = vtos %v369
    %s371 = sadd.f32 %s360, %s370
    %v372 = vrcp.pop 240.0
    %s373 = vtos %v372
    %s374 = smul.f32 %s371, %s373
    %s375 = smul.f32 %s374, 4.0
    %v376 = vstv %s375
    %v377 = vrcp.pop %v376
    %s378 = vtos %v377
    %s379 = smul.f32 -1.0, %s378
    %v380 = vstv %s379
    %v381 = vmul.f32 %v153, %v380
    %v382 = vmul.f32 %v381, 1.442695
    %v383 = vpow.pop %v382
    %v384 = vmul.f32 %v383, %v383
    %v385 = vmul.f32 %v384, %v384
    %v386 = vmul.f32 %v385, %v385
    %v387 = vmul.f32 %v386, %v386
    %v388 = vadd.f32 %v387, %v386
    %v389 = vadd.f32 %v388, %v385
    %v390 = vadd.f32 %v389, %v384
    %v391 = vadd.f32 %v390, %v383
    %v392 = vsel %vm338, %v391, 0.0
    %393 = vadd.xlane.f32.xlu0 %v392
    %v394 = vpop.xlane.xlu0 %393
    %v395 = vrot.slane %v394, 4
    %v396 = vadd.f32 %v394, %v395
    %v397 = vrot.slane %v396, 2
    %v398 = vadd.f32 %v396, %v397
    %v399 = vrot.slane %v398, 1
    %v400 = vadd.f32 %v398, %v399
    %s401 = vtos %v400
    %v402 = vrcp.pop 64.0
    %s403 = vtos %v402
    %s404 = smul.f32 %s401, %s403
    %v405 = vmul.f32 %v263, %v380
    %v406 = vmul.f32 %v405, 1.442695
    %v407 = vpow.pop %v406
    %v408 = vmul.f32 %v407, %v407
    %v409 = vmul.f32 %v408, %v408
    %v410 = vmul.f32 %v409, %v409
    %v411 = vmul.f32 %v410, %v410
    %v412 = vadd.f32 %v411, %v410
    %v413 = vadd.f32 %v412, %v409
    %v414 = vadd.f32 %v413, %v408
    %v415 = vadd.f32 %v414, %v407
    %v416 = vsel %vm338, %v415, 0.0
    %417 = vadd.xlane.f32.xlu0 %v416
    %v418 = vpop.xlane.xlu0 %417
    %v419 = vrot.slane %v418, 4
    %v420 = vadd.f32 %v418, %v419
    %v421 = vrot.slane %v420, 2
    %v422 = vadd.f32 %v420, %v421
    %v423 = vrot.slane %v422, 1
    %v424 = vadd.f32 %v422, %v423
    %s425 = vtos %v424
    %v426 = vrcp.pop 64.0
    %s427 = vtos %v426
    %s428 = smul.f32 %s425, %s427
    %v429 = vmul.f32 %v337, %v380
    %v430 = vmul.f32 %v429, 1.442695
    %v431 = vpow.pop %v430
    %v432 = vmul.f32 %v431, %v431
    %v433 = vmul.f32 %v432, %v432
    %v434 = vmul.f32 %v433, %v433
    %v435 = vmul.f32 %v434, %v434
    %v436 = vadd.f32 %v435, %v434
    %v437 = vadd.f32 %v436, %v433
    %v438 = vadd.f32 %v437, %v432
    %v439 = vadd.f32 %v438, %v431
    %v440 = vsel %vm338, %v439, 0.0
    %441 = vadd.xlane.f32.xlu0 %v440
    %v442 = vpop.xlane.xlu0 %441
    %v443 = vrot.slane %v442, 4
    %v444 = vadd.f32 %v442, %v443
    %v445 = vrot.slane %v444, 2
    %v446 = vadd.f32 %v444, %v445
    %v447 = vrot.slane %v446, 1
    %v448 = vadd.f32 %v446, %v447
    %s449 = vtos %v448
    %v450 = vrcp.pop 64.0
    %s451 = vtos %v450
    %s452 = smul.f32 %s449, %s451
    %s453 = smul.f32 %s428, 2.0
    %s454 = ssub.f32 %s404, %s453
    %s455 = sadd.f32 %s454, %s452
    %s456 = scalar_lea.smem [#allocation7], 0
    %457 = sst [smem:[%s456]] %s455
    // Predicated region
    $region18: #{tpu_custom_call.1} parent=1 // pred_check
      _
    $region19: #{tpu_custom_call.1} parent=1 // pred_check_branch
      %459 = sbr.rel (0) target = $region21
    $region20: #{tpu_custom_call.1} parent=1 // pred_region
      %s461 = ssub.s32 16, 16
      %462 = vsyncadd [#allocation4], %s461
      %465 = dma.smem_to_hbm [#allocation7], 16, %s2, [#allocation4]
    $region21: #{tpu_custom_call.1} parent=1 // pred_fallthru
      _
    // Predicated region
    $region22: #{tpu_custom_call.1} parent=1 // pred_check
      _
    $region23: #{tpu_custom_call.1} parent=1 // pred_check_branch
      %467 = sbr.rel (0) target = $region25
    $region24: #{tpu_custom_call.1} parent=1 // pred_region
      %468 = dma.done [#allocation4], 16
    $region25: #{tpu_custom_call.1} parent=1 // pred_fallthru
      _
    %469 = sfence
    %470 = vsyncpa [#allocation3], 1
    %471 = vsyncpa [#allocation6], 1
    %472 = vsyncpa [#allocation4], 1

</llo_original>
